<compile_context>
chip_gen: v6e
topology: v6e:2x2x1
jax: 0.10.0
libtpu: 0.0.40
codegen_flags: <defaults>
</compile_context>

<pallas_src>
import jax
import jax.numpy as jnp
from jax.experimental import pallas as pl
from jax.experimental.pallas import tpu as pltpu

LN_EPS = 1e-5  # nn.LayerNorm default


# ----------------------------------------------------------------------------
# Kernel 0 (tiny, run once): style projection  sp = style @ Ws + b   -> (B, D)
# ----------------------------------------------------------------------------
def style_proj_kernel(s_ref, ws_ref, b_ref, o_ref):
    y = jnp.dot(s_ref[...], ws_ref[...], preferred_element_type=jnp.float32)
    o_ref[...] = (y + b_ref[...]).astype(o_ref.dtype)


def style_projection(style, ws, b):
    B, D = style.shape
    return pl.pallas_call(
        style_proj_kernel,
        out_shape=jax.ShapeDtypeStruct((B, D), jnp.float32),
        grid=(1,),
        in_specs=[
            pl.BlockSpec((B, D), lambda i: (0, 0)),
            pl.BlockSpec((D, D), lambda i: (0, 0)),
            pl.BlockSpec((1, D), lambda i: (0, 0)),
        ],
        out_specs=pl.BlockSpec((B, D), lambda i: (0, 0)),
    )(style, ws, b)


# ----------------------------------------------------------------------------
# Fused kernel: (residual add) -> LayerNorm -> mixer matmul (+ style proj)
#   new_residual = residual + hidden_states      (drop_path = Identity)
#   normed       = LayerNorm(new_residual) * ln_w + ln_b      (stays in VMEM)
#   out          = normed @ W + style_proj                    (MXU, f32 acc)
# Returns (out, new_residual) like the prenorm Block (residual_in_fp32=True).
# ----------------------------------------------------------------------------
def _ln_mix(new_res, sp, ln_w, ln_b, w, out_ref, res_ref):
    mean = jnp.mean(new_res, axis=-1, keepdims=True)
    xc = new_res - mean
    var = jnp.mean(xc * xc, axis=-1, keepdims=True)
    normed = xc * jax.lax.rsqrt(var + LN_EPS) * ln_w + ln_b
    y = jnp.dot(normed, w, preferred_element_type=jnp.float32)
    out_ref[0] = (y + sp).astype(out_ref.dtype)
    res_ref[0] = new_res.astype(res_ref.dtype)   # residual_in_fp32


def fused_add_ln_mixer_kernel(h_ref, r_ref, sp_ref, ln_w_ref, ln_b_ref, w_ref,
                              out_ref, res_ref):
    new_res = r_ref[0].astype(jnp.float32) + h_ref[0].astype(jnp.float32)
    _ln_mix(new_res, sp_ref[0], ln_w_ref[...], ln_b_ref[...], w_ref[...],
            out_ref, res_ref)


def fused_ln_mixer_kernel(h_ref, sp_ref, ln_w_ref, ln_b_ref, w_ref,
                          out_ref, res_ref):
    # First block: residual is None  =>  residual := hidden_states (no zeros DMA).
    new_res = h_ref[0].astype(jnp.float32)
    _ln_mix(new_res, sp_ref[0], ln_w_ref[...], ln_b_ref[...], w_ref[...],
            out_ref, res_ref)


# ----------------------------------------------------------------------------
# Block forward: Add -> LN -> Mixer, returns (hidden_states, residual)
# ----------------------------------------------------------------------------
def block_forward_impl(hidden_states, style, residual, params, *, row_tile=512):
    B, L, D = hidden_states.shape

    # Style projection computed once per batch row, broadcast over L via index_map.
    style_proj = style_projection(style, params["mix_ws"], params["mix_b"])
    style_proj = style_proj.reshape(B, 1, D)

    # Row tile: either a multiple of 8 (row_tile) or the full sequence length.
    tl = min(row_tile, L)
    grid = (B, pl.cdiv(L, tl))

    row_spec = pl.BlockSpec((1, tl, D), lambda b, l: (b, l, 0))
    style_spec = pl.BlockSpec((1, 1, D), lambda b, l: (b, 0, 0))
    vec_spec = pl.BlockSpec((1, D), lambda b, l: (0, 0))
    weight_spec = pl.BlockSpec((D, D), lambda b, l: (0, 0))

    out_shape = (
        jax.ShapeDtypeStruct((B, L, D), hidden_states.dtype),
        jax.ShapeDtypeStruct((B, L, D), jnp.float32),   # residual_in_fp32
    )
    out_specs = (row_spec, row_spec)
    cparams = pltpu.CompilerParams(
        dimension_semantics=("parallel", "parallel"),
        vmem_limit_bytes=64 * 1024 * 1024,
    )

    if residual is None:
        return pl.pallas_call(
            fused_ln_mixer_kernel,
            out_shape=out_shape,
            grid=grid,
            in_specs=[row_spec, style_spec, vec_spec, vec_spec, weight_spec],
            out_specs=out_specs,
            compiler_params=cparams,
        )(hidden_states, style_proj, params["ln_w"], params["ln_b"],
          params["mix_w"])

    return pl.pallas_call(
        fused_add_ln_mixer_kernel,
        out_shape=out_shape,
        grid=grid,
        in_specs=[row_spec, row_spec, style_spec, vec_spec, vec_spec, weight_spec],
        out_specs=out_specs,
        compiler_params=cparams,
    )(hidden_states, residual, style_proj, params["ln_w"], params["ln_b"],
      params["mix_w"])


block_forward = jax.jit(block_forward_impl)


# ----------------------------------------------------------------------------
# Pure-JAX reference (matches the PyTorch Block with the linear style mixer)
# ----------------------------------------------------------------------------
def reference_forward(hidden_states, style, residual, params):
    if residual is None:
        residual = hidden_states
    else:
        residual = residual + hidden_states
    residual = residual.astype(jnp.float32)
    mean = jnp.mean(residual, axis=-1, keepdims=True)
    var = jnp.mean((residual - mean) ** 2, axis=-1, keepdims=True)
    normed = (residual - mean) * jax.lax.rsqrt(var + LN_EPS)
    normed = normed * params["ln_w"][0] + params["ln_b"][0]
    mixed = (
        jnp.einsum("bld,de->ble", normed, params["mix_w"])
        + jnp.einsum("bd,de->be", style, params["mix_ws"])[:, None, :]
        + params["mix_b"][0]
    )
    return mixed.astype(hidden_states.dtype), residual


if __name__ == "__main__":
    # D kept a multiple of 128 -> lane-dense stores and full MXU lane width.
    B, L, D = 2, 16, 128
    key = jax.random.PRNGKey(0)
    k1, k2, k3, k4 = jax.random.split(key, 4)

    hidden_states = jax.random.normal(k1, (B, L, D), jnp.float32)
    style = jax.random.normal(k2, (B, D), jnp.float32)

    params = {
        # nn.LayerNorm default init: weight=1, bias=0 (kept as (1, D) 2D arrays)
        "ln_w": jnp.ones((1, D), jnp.float32),
        "ln_b": jnp.zeros((1, D), jnp.float32),
        # deterministic mixer weights
        "mix_w": jax.random.normal(k3, (D, D), jnp.float32) * 0.05,
        "mix_ws": jax.random.normal(k4, (D, D), jnp.float32) * 0.05,
        "mix_b": jnp.zeros((1, D), jnp.float32),
    }

    # First block call (residual is None -> no-residual kernel variant) ...
    h1, r1 = block_forward(hidden_states, style, None, params)
    # ... then a second call exercising the fused residual-add path.
    h2, r2 = block_forward(h1, style, r1, params)
    jax.block_until_ready((h2, r2))

    # Check against the pure-JAX reference.
    ref_h1, ref_r1 = reference_forward(hidden_states, style, None, params)
    ref_h2, ref_r2 = reference_forward(ref_h1, style, ref_r1, params)
    assert jnp.allclose(h1, ref_h1, atol=1e-2, rtol=1e-2)
    assert jnp.allclose(r1, ref_r1, atol=1e-2, rtol=1e-2)
    assert jnp.allclose(h2, ref_h2, atol=1e-2, rtol=1e-2)
    assert jnp.allclose(r2, ref_r2, atol=1e-2, rtol=1e-2)

    print("KERNEL_OK")
</pallas_src>

<mosaic_0001>
module attributes {stable_mosaic.version = 11 : i64} {
  func.func @style_proj_kernel(%arg0: i32, %arg1: memref<2x128xf32, #tpu.memory_space<vmem>>, %arg2: memref<128x128xf32, #tpu.memory_space<vmem>>, %arg3: memref<1x128xf32, #tpu.memory_space<vmem>>, %arg4: memref<2x128xf32, #tpu.memory_space<vmem>>) attributes {dimension_semantics = [#tpu.dimension_semantics<arbitrary>], iteration_bounds = array<i64: 1>, scalar_prefetch = 0 : i64, scratch_operands = 0 : i64, tpu.core_type = #tpu.core_type<tc>, window_params = [{pipeline_mode = #tpu.pipeline_mode<synchronous>, transform_indices = @transform_0, window_bounds = array<i64: 2, 128>}, {pipeline_mode = #tpu.pipeline_mode<synchronous>, transform_indices = @transform_1, window_bounds = array<i64: 128, 128>}, {pipeline_mode = #tpu.pipeline_mode<synchronous>, transform_indices = @transform_2, window_bounds = array<i64: 1, 128>}, {pipeline_mode = #tpu.pipeline_mode<synchronous>, transform_indices = @transform_3, window_bounds = array<i64: 2, 128>}]} {
    %c0 = arith.constant 0 : index
    %c0_0 = arith.constant 0 : index
    %0 = vector.load %arg1[%c0, %c0_0] : memref<2x128xf32, #tpu.memory_space<vmem>>, vector<2x128xf32>
    %c0_1 = arith.constant 0 : index
    %c0_2 = arith.constant 0 : index
    %1 = vector.load %arg2[%c0_1, %c0_2] : memref<128x128xf32, #tpu.memory_space<vmem>>, vector<128x128xf32>
    %cst = arith.constant dense<0.000000e+00> : vector<2x128xf32>
    %2 = tpu.matmul %0, %1, %cst {dimension_numbers = #tpu.dot_dimension_numbers<[1], [0], [0], [1], [0, 0, 1, 1], [], []>} : vector<2x128xf32>, vector<128x128xf32>, vector<2x128xf32> -> vector<2x128xf32>
    %c0_3 = arith.constant 0 : index
    %c0_4 = arith.constant 0 : index
    %3 = vector.load %arg3[%c0_3, %c0_4] : memref<1x128xf32, #tpu.memory_space<vmem>>, vector<1x128xf32>
    %4 = vector.broadcast %3 : vector<1x128xf32> to vector<2x128xf32>
    %5 = arith.addf %2, %4 : vector<2x128xf32>
    %c0_5 = arith.constant 0 : index
    %c0_6 = arith.constant 0 : index
    %6 = vector.load %arg4[%c0_5, %c0_6] : memref<2x128xf32, #tpu.memory_space<vmem>>, vector<2x128xf32>
    tpu.vector_store %arg4[%c0_5, %c0_6], %5 {strides = array<i32>} : memref<2x128xf32, #tpu.memory_space<vmem>>, vector<2x128xf32>,
    return
  }
  func.func @transform_0(%arg0: i32) -> (i32, i32) {
    %c0_i32 = arith.constant 0 : i32
    %c0_i32_0 = arith.constant 0 : i32
    %c0_i32_1 = arith.constant 0 : i32
    return %c0_i32, %c0_i32_0 : i32, i32
  }
  func.func @transform_1(%arg0: i32) -> (i32, i32) {
    %c0_i32 = arith.constant 0 : i32
    %c0_i32_0 = arith.constant 0 : i32
    %c0_i32_1 = arith.constant 0 : i32
    return %c0_i32, %c0_i32_0 : i32, i32
  }
  func.func @transform_2(%arg0: i32) -> (i32, i32) {
    %c0_i32 = arith.constant 0 : i32
    %c0_i32_0 = arith.constant 0 : i32
    %c0_i32_1 = arith.constant 0 : i32
    return %c0_i32, %c0_i32_0 : i32, i32
  }
  func.func @transform_3(%arg0: i32) -> (i32, i32) {
    %c0_i32 = arith.constant 0 : i32
    %c0_i32_0 = arith.constant 0 : i32
    %c0_i32_1 = arith.constant 0 : i32
    return %c0_i32, %c0_i32_0 : i32, i32
  }
}

module attributes {stable_mosaic.version = 11 : i64} {
  func.func @fused_ln_mixer_kernel(%arg0: i32, %arg1: i32, %arg2: memref<1x16x128xf32, #tpu.memory_space<vmem>>, %arg3: memref<1x1x128xf32, #tpu.memory_space<vmem>>, %arg4: memref<1x128xf32, #tpu.memory_space<vmem>>, %arg5: memref<1x128xf32, #tpu.memory_space<vmem>>, %arg6: memref<128x128xf32, #tpu.memory_space<vmem>>, %arg7: memref<1x16x128xf32, #tpu.memory_space<vmem>>, %arg8: memref<1x16x128xf32, #tpu.memory_space<vmem>>) attributes {dimension_semantics = [#tpu.dimension_semantics<parallel>, #tpu.dimension_semantics<parallel>], iteration_bounds = array<i64: 2, 1>, scalar_prefetch = 0 : i64, scratch_operands = 0 : i64, tpu.core_type = #tpu.core_type<tc>, window_params = [{transform_indices = @transform_0, window_bounds = array<i64: 1, 16, 128>}, {transform_indices = @transform_1, window_bounds = array<i64: 1, 1, 128>}, {pipeline_mode = #tpu.pipeline_mode<synchronous>, transform_indices = @transform_2, window_bounds = array<i64: 1, 128>}, {pipeline_mode = #tpu.pipeline_mode<synchronous>, transform_indices = @transform_3, window_bounds = array<i64: 1, 128>}, {pipeline_mode = #tpu.pipeline_mode<synchronous>, transform_indices = @transform_4, window_bounds = array<i64: 128, 128>}, {transform_indices = @transform_5, window_bounds = array<i64: 1, 16, 128>}, {transform_indices = @transform_6, window_bounds = array<i64: 1, 16, 128>}]} {
    %c0 = arith.constant 0 : index
    %c0_0 = arith.constant 0 : index
    %c0_1 = arith.constant 0 : index
    %0 = vector.load %arg2[%c0, %c0_0, %c0_1] : memref<1x16x128xf32, #tpu.memory_space<vmem>>, vector<1x16x128xf32>
    %1 = vector.shape_cast %0 : vector<1x16x128xf32> to vector<16x128xf32>
    %c0_2 = arith.constant 0 : index
    %c0_3 = arith.constant 0 : index
    %c0_4 = arith.constant 0 : index
    %2 = vector.load %arg3[%c0_2, %c0_3, %c0_4] : memref<1x1x128xf32, #tpu.memory_space<vmem>>, vector<1x1x128xf32>
    %3 = vector.shape_cast %2 : vector<1x1x128xf32> to vector<1x128xf32>
    %c0_5 = arith.constant 0 : index
    %c0_6 = arith.constant 0 : index
    %4 = vector.load %arg4[%c0_5, %c0_6] : memref<1x128xf32, #tpu.memory_space<vmem>>, vector<1x128xf32>
    %c0_7 = arith.constant 0 : index
    %c0_8 = arith.constant 0 : index
    %5 = vector.load %arg5[%c0_7, %c0_8] : memref<1x128xf32, #tpu.memory_space<vmem>>, vector<1x128xf32>
    %c0_9 = arith.constant 0 : index
    %c0_10 = arith.constant 0 : index
    %6 = vector.load %arg6[%c0_9, %c0_10] : memref<128x128xf32, #tpu.memory_space<vmem>>, vector<128x128xf32>
    %cst = arith.constant dense<0.000000e+00> : vector<16xf32>
    %7 = vector.multi_reduction <add>, %1, %cst [1] : vector<16x128xf32> to vector<16xf32>
    %8 = vector.shape_cast %7 : vector<16xf32> to vector<16x1xf32>
    %cst_11 = arith.constant 1.280000e+02 : f32
    %9 = vector.broadcast %cst_11 : f32 to vector<16x1xf32>
    %10 = arith.divf %8, %9 : vector<16x1xf32>
    %11 = vector.broadcast %10 : vector<16x1xf32> to vector<16x128xf32>
    %12 = arith.subf %1, %11 : vector<16x128xf32>
    %13 = arith.mulf %12, %12 : vector<16x128xf32>
    %cst_12 = arith.constant dense<0.000000e+00> : vector<16xf32>
    %14 = vector.multi_reduction <add>, %13, %cst_12 [1] : vector<16x128xf32> to vector<16xf32>
    %15 = vector.shape_cast %14 : vector<16xf32> to vector<16x1xf32>
    %cst_13 = arith.constant 1.280000e+02 : f32
    %16 = vector.broadcast %cst_13 : f32 to vector<16x1xf32>
    %17 = arith.divf %15, %16 : vector<16x1xf32>
    %cst_14 = arith.constant 9.99999974E-6 : f32
    %18 = vector.broadcast %cst_14 : f32 to vector<16x1xf32>
    %19 = arith.addf %17, %18 : vector<16x1xf32>
    %20 = math.rsqrt %19 : vector<16x1xf32>
    %21 = vector.broadcast %20 : vector<16x1xf32> to vector<16x128xf32>
    %22 = arith.mulf %12, %21 : vector<16x128xf32>
    %23 = vector.broadcast %4 : vector<1x128xf32> to vector<16x128xf32>
    %24 = arith.mulf %22, %23 : vector<16x128xf32>
    %25 = vector.broadcast %5 : vector<1x128xf32> to vector<16x128xf32>
    %26 = arith.addf %24, %25 : vector<16x128xf32>
    %cst_15 = arith.constant dense<0.000000e+00> : vector<16x128xf32>
    %27 = tpu.matmul %26, %6, %cst_15 {dimension_numbers = #tpu.dot_dimension_numbers<[1], [0], [0], [1], [0, 0, 1, 1], [], []>} : vector<16x128xf32>, vector<128x128xf32>, vector<16x128xf32> -> vector<16x128xf32>
    %28 = vector.broadcast %3 : vector<1x128xf32> to vector<16x128xf32>
    %29 = arith.addf %27, %28 : vector<16x128xf32>
    %c0_16 = arith.constant 0 : index
    %c0_17 = arith.constant 0 : index
    %c0_18 = arith.constant 0 : index
    %30 = vector.load %arg7[%c0_16, %c0_17, %c0_18] : memref<1x16x128xf32, #tpu.memory_space<vmem>>, vector<1x16x128xf32>
    %31 = vector.shape_cast %30 : vector<1x16x128xf32> to vector<16x128xf32>
    %32 = vector.shape_cast %29 : vector<16x128xf32> to vector<1x16x128xf32>
    tpu.vector_store %arg7[%c0_16, %c0_17, %c0_18], %32 {strides = array<i32>} : memref<1x16x128xf32, #tpu.memory_space<vmem>>, vector<1x16x128xf32>,
    %c0_19 = arith.constant 0 : index
    %c0_20 = arith.constant 0 : index
    %c0_21 = arith.constant 0 : index
    %33 = vector.load %arg8[%c0_19, %c0_20, %c0_21] : memref<1x16x128xf32, #tpu.memory_space<vmem>>, vector<1x16x128xf32>
    %34 = vector.shape_cast %33 : vector<1x16x128xf32> to vector<16x128xf32>
    %35 = vector.shape_cast %1 : vector<16x128xf32> to vector<1x16x128xf32>
    tpu.vector_store %arg8[%c0_19, %c0_20, %c0_21], %35 {strides = array<i32>} : memref<1x16x128xf32, #tpu.memory_space<vmem>>, vector<1x16x128xf32>,
    return
  }
  func.func @transform_0(%arg0: i32, %arg1: i32) -> (i32, i32, i32) {
    %c0_i32 = arith.constant 0 : i32
    %c0_i32_0 = arith.constant 0 : i32
    return %arg0, %arg1, %c0_i32 : i32, i32, i32
  }
  func.func @transform_1(%arg0: i32, %arg1: i32) -> (i32, i32, i32) {
    %c0_i32 = arith.constant 0 : i32
    %c0_i32_0 = arith.constant 0 : i32
    %c0_i32_1 = arith.constant 0 : i32
    return %arg0, %c0_i32, %c0_i32_0 : i32, i32, i32
  }
  func.func @transform_2(%arg0: i32, %arg1: i32) -> (i32, i32) {
    %c0_i32 = arith.constant 0 : i32
    %c0_i32_0 = arith.constant 0 : i32
    %c0_i32_1 = arith.constant 0 : i32
    return %c0_i32, %c0_i32_0 : i32, i32
  }
  func.func @transform_3(%arg0: i32, %arg1: i32) -> (i32, i32) {
    %c0_i32 = arith.constant 0 : i32
    %c0_i32_0 = arith.constant 0 : i32
    %c0_i32_1 = arith.constant 0 : i32
    return %c0_i32, %c0_i32_0 : i32, i32
  }
  func.func @transform_4(%arg0: i32, %arg1: i32) -> (i32, i32) {
    %c0_i32 = arith.constant 0 : i32
    %c0_i32_0 = arith.constant 0 : i32
    %c0_i32_1 = arith.constant 0 : i32
    return %c0_i32, %c0_i32_0 : i32, i32
  }
  func.func @transform_5(%arg0: i32, %arg1: i32) -> (i32, i32, i32) {
    %c0_i32 = arith.constant 0 : i32
    %c0_i32_0 = arith.constant 0 : i32
    return %arg0, %arg1, %c0_i32 : i32, i32, i32
  }
  func.func @transform_6(%arg0: i32, %arg1: i32) -> (i32, i32, i32) {
    %c0_i32 = arith.constant 0 : i32
    %c0_i32_0 = arith.constant 0 : i32
    return %arg0, %arg1, %c0_i32 : i32, i32, i32
  }
}

</mosaic_0001>

<llo_original>
// kernel: block_forward_impl.2
$region0: #{block_forward_impl.2}
  #allocation0 [shape = 'u32[]', space=smem, size = 0x4, offset = 0x4, fixed_abs, tag = 'smem constant byte address 0x4 - core index']
  #allocation1 [shape = 'u32[144,128]{1,0:T(1,128)}', space=vmem, size = 0x12000, scoped, tag = 'internal scratch']
  %s0 = inlined_call_operand.hbm [shape: f32[2,128], index: 0, kind: input, shape index: {}]
  %s1 = inlined_call_operand.hbm [shape: f32[128,128], index: 1, kind: input, shape index: {}]
  %s2 = inlined_call_operand.hbm [shape: f32[1,128], index: 2, kind: input, shape index: {}]
  %s3 = inlined_call_operand.vmem [shape: f32[2,128], index: 3, kind: output, shape index: {}]
  %s4 = sld [smem:[#allocation0]]
  $region34: #{block_forward_impl.2} parent=0
    _
  %s6 = ssub.s32 1, %s4
  %s7 = scalar_select 0, %s6, %s4
  $region1: #{block_forward_impl.2} parent=0
    #allocation2 [shape = 'u8[1024]{0}', space=vmem, size = 0x400, scoped, tag = 'input window, operand 0, single buffered']
    #allocation3 [shape = 's32[1]{0}', space=sflag, size = 0x4, scoped, tag = 'scoped memory for block_forward_impl.2']
    #allocation4 [shape = 'u8[65536]{0}', space=vmem, size = 0x10000, scoped, tag = 'input window, operand 1, single buffered']
    #allocation5 [shape = 's32[1]{0}', space=sflag, size = 0x4, scoped, tag = 'scoped memory for block_forward_impl.2']
    #allocation6 [shape = 'u8[512]{0}', space=vmem, size = 0x400, scoped, tag = 'input window, operand 2, single buffered']
    %8 = vsyncpa [#allocation3], 0
    %9 = vsyncpa [#allocation5], 0
    // Predicated region
    $region2: #{block_forward_impl.2} parent=1 // pred_check
      _
    $region3: #{block_forward_impl.2} parent=1 // pred_check_branch
      %11 = sbr.rel (0) target = $region5
    $region4: #{block_forward_impl.2} parent=1 // pred_region
      %s13 = ssub.s32 32, 32
      %14 = vsyncadd [#allocation3], %s13
      %s16 = sshll.u32 [#allocation2], 4
      %s17 = int_to_ptr.vmem [resolvable:$true] %s16
      %19 = dma.hbm_to_vmem [thread:$0]  %s0, 32, %s17, [#allocation3]
    $region5: #{block_forward_impl.2} parent=1 // pred_fallthru
      _
    // Predicated region
    $region6: #{block_forward_impl.2} parent=1 // pred_check
      _
    $region7: #{block_forward_impl.2} parent=1 // pred_check_branch
      %21 = sbr.rel (0) target = $region9
    $region8: #{block_forward_impl.2} parent=1 // pred_region
      %s23 = ssub.s32 2048, 2048
      %24 = vsyncadd [#allocation5], %s23
      %s25 = sshll.u32 [#allocation4], 4
      %s26 = int_to_ptr.vmem [resolvable:$true] %s25
      %31 = dma.hbm_to_vmem [thread:$0]  %s1, 2048, %s26, [#allocation5], 128, 128, 8
    $region9: #{block_forward_impl.2} parent=1 // pred_fallthru
      _
    // Predicated region
    $region10: #{block_forward_impl.2} parent=1 // pred_check
      _
    $region11: #{block_forward_impl.2} parent=1 // pred_check_branch
      %33 = sbr.rel (0) target = $region13
    $region12: #{block_forward_impl.2} parent=1 // pred_region
      %s35 = ssub.s32 16, 16
      %36 = vsyncadd [#allocation5], %s35
      %s38 = sshll.u32 [#allocation6], 4
      %s39 = int_to_ptr.vmem [resolvable:$true] %s38
      %41 = dma.hbm_to_vmem [thread:$0]  %s2, 16, %s39, [#allocation5]
    $region13: #{block_forward_impl.2} parent=1 // pred_fallthru
      _
    // Predicated region
    $region14: #{block_forward_impl.2} parent=1 // pred_check
      _
    $region15: #{block_forward_impl.2} parent=1 // pred_check_branch
      %43 = sbr.rel (0) target = $region17
    $region16: #{block_forward_impl.2} parent=1 // pred_region
      %44 = dma.done [#allocation3], 32
    $region17: #{block_forward_impl.2} parent=1 // pred_fallthru
      _
    // Predicated region
    $region18: #{block_forward_impl.2} parent=1 // pred_check
      _
    $region19: #{block_forward_impl.2} parent=1 // pred_check_branch
      %46 = sbr.rel (0) target = $region21
    $region20: #{block_forward_impl.2} parent=1 // pred_region
      %47 = dma.done [#allocation5], 2048
    $region21: #{block_forward_impl.2} parent=1 // pred_fallthru
      _
    // Predicated region
    $region22: #{block_forward_impl.2} parent=1 // pred_check
      _
    $region23: #{block_forward_impl.2} parent=1 // pred_check_branch
      %49 = sbr.rel (0) target = $region25
    $region24: #{block_forward_impl.2} parent=1 // pred_region
      %50 = dma.done [#allocation5], 16
    $region25: #{block_forward_impl.2} parent=1 // pred_fallthru
      _
    %v51 = vld [vmem:[#allocation2] sm:$0x3]
    %v52 = vld [vmem:[#allocation4] sm:$0xff]
    %v53 = vld [vmem:[#allocation4 + $0x8] sm:$0xff]
    %v54 = vld [vmem:[#allocation4 + $0x10] sm:$0xff]
    %v55 = vld [vmem:[#allocation4 + $0x18] sm:$0xff]
    %v56 = vld [vmem:[#allocation4 + $0x20] sm:$0xff]
    %v57 = vld [vmem:[#allocation4 + $0x28] sm:$0xff]
    %v58 = vld [vmem:[#allocation4 + $0x30] sm:$0xff]
    %v59 = vld [vmem:[#allocation4 + $0x38] sm:$0xff]
    %v60 = vld [vmem:[#allocation4 + $0x40] sm:$0xff]
    %v61 = vld [vmem:[#allocation4 + $0x48] sm:$0xff]
    %v62 = vld [vmem:[#allocation4 + $0x50] sm:$0xff]
    %v63 = vld [vmem:[#allocation4 + $0x58] sm:$0xff]
    %v64 = vld [vmem:[#allocation4 + $0x60] sm:$0xff]
    %v65 = vld [vmem:[#allocation4 + $0x68] sm:$0xff]
    %v66 = vld [vmem:[#allocation4 + $0x70] sm:$0xff]
    %v67 = vld [vmem:[#allocation4 + $0x78] sm:$0xff]
    %v68 = vld [vmem:[#allocation6] sm:$0x1]
    %v70 = vlaneseq
    %v71 = vshrl.u32 %v70, 7
    %v72 = vsub.s32 0, %v71
    %v73 = vrot.slane %v68, %v72
    %75 = vmatprep.subr.mxu0 0.0
    %76 = vmatpush1.msra.mxu0 %v67
    %77 = vmatprep.subr.mxu0 0.0
    %78 = vmatpush1.msra.mxu0 %v66
    %79 = vmatprep.subr.mxu0 0.0
    %80 = vmatpush1.msra.mxu0 %v65
    %81 = vmatprep.subr.mxu0 0.0
    %82 = vmatpush1.msra.mxu0 %v64
    %83 = vmatprep.subr.mxu0 0.0
    %84 = vmatpush1.msra.mxu0 %v63
    %85 = vmatprep.subr.mxu0 0.0
    %86 = vmatpush1.msra.mxu0 %v62
    %87 = vmatprep.subr.mxu0 0.0
    %88 = vmatpush1.msra.mxu0 %v61
    %89 = vmatprep.subr.mxu0 0.0
    %90 = vmatpush1.msra.mxu0 %v60
    %91 = vmatprep.subr.mxu0 0.0
    %92 = vmatpush1.msra.mxu0 %v59
    %93 = vmatprep.subr.mxu0 0.0
    %94 = vmatpush1.msra.mxu0 %v58
    %95 = vmatprep.subr.mxu0 0.0
    %96 = vmatpush1.msra.mxu0 %v57
    %97 = vmatprep.subr.mxu0 0.0
    %98 = vmatpush1.msra.mxu0 %v56
    %99 = vmatprep.subr.mxu0 0.0
    %100 = vmatpush1.msra.mxu0 %v55
    %101 = vmatprep.subr.mxu0 0.0
    %102 = vmatpush1.msra.mxu0 %v54
    %103 = vmatprep.subr.mxu0 0.0
    %104 = vmatpush1.msra.mxu0 %v53
    %105 = vmatprep.subr.mxu0 0.0
    %106 = vmatpush1.msra.mxu0 %v52
    %107 = vmatprep.subr.mxu0 0.0
    %108 = vmatpush2.msra.mxu0 0.0
    %109 = vmatprep.subr.mxu0 0.0
    %110 = vmatpush2.msra.mxu0 0.0
    %111 = vmatprep.subr.mxu0 0.0
    %112 = vmatpush2.msra.mxu0 0.0
    %113 = vmatprep.subr.mxu0 0.0
    %114 = vmatpush2.msra.mxu0 0.0
    %115 = vmatprep.subr.mxu0 0.0
    %116 = vmatpush2.msra.mxu0 0.0
    %117 = vmatprep.subr.mxu0 0.0
    %118 = vmatpush2.msra.mxu0 0.0
    %119 = vmatprep.subr.mxu0 0.0
    %120 = vmatpush2.msra.mxu0 0.0
    %121 = vmatprep.subr.mxu0 0.0
    %122 = vmatpush2.msra.mxu0 0.0
    %123 = vmatprep.subr.mxu0 0.0
    %124 = vmatpush2.msra.mxu0 0.0
    %125 = vmatprep.subr.mxu0 0.0
    %126 = vmatpush2.msra.mxu0 0.0
    %127 = vmatprep.subr.mxu0 0.0
    %128 = vmatpush2.msra.mxu0 0.0
    %129 = vmatprep.subr.mxu0 0.0
    %130 = vmatpush2.msra.mxu0 0.0
    %131 = vmatprep.subr.mxu0 0.0
    %132 = vmatpush2.msra.mxu0 0.0
    %133 = vmatprep.subr.mxu0 0.0
    %134 = vmatpush2.msra.mxu0 0.0
    %135 = vmatprep.subr.mxu0 0.0
    %136 = vmatpush2.msra.mxu0 0.0
    %137 = vmatprep.subr.mxu0 0.0
    %138 = vmatpush2.msra.mxu0 0.0
    %139 = vmatprep.mubr.f32.mxu0 0.0
    %140 = vmatmul.mubr.f32.gmra.mxu0 %v51
    %v141 = vpop.f32.mrf.mxu0
    %v142 = vadd.f32 %v73, %v141
    %v143 = vpop.f32.mrf.mxu0
    %144 = vdwg.mxu0
    %145 = vst [vmem:[%s3] sm:$0x3] %v142
    // Predicated region
    $region26: #{block_forward_impl.2} parent=1 // pred_check
      _
    $region27: #{block_forward_impl.2} parent=1 // pred_check_branch
      %147 = sbr.rel (0) target = $region29
    $region28: #{block_forward_impl.2} parent=1 // pred_region
      _
    $region29: #{block_forward_impl.2} parent=1 // pred_fallthru
      _
    // Predicated region
    $region30: #{block_forward_impl.2} parent=1 // pred_check
      _
    $region31: #{block_forward_impl.2} parent=1 // pred_check_branch
      %149 = sbr.rel (0) target = $region33
    $region32: #{block_forward_impl.2} parent=1 // pred_region
      _
    $region33: #{block_forward_impl.2} parent=1 // pred_fallthru
      _
    %150 = vsyncpa [#allocation3], 1
    %151 = vsyncpa [#allocation5], 1

// kernel: block_forward_impl.3
$region0: #{block_forward_impl.3}
  #allocation0 [shape = 'u32[]', space=smem, size = 0x4, offset = 0x4, fixed_abs, tag = 'smem constant byte address 0x4 - core index']
  #allocation1 [shape = 'u32[144,128]{1,0:T(1,128)}', space=vmem, size = 0x12000, scoped, tag = 'internal scratch']
  %s0 = inlined_call_operand.hbm [shape: f32[2,16,128], index: 0, kind: input, shape index: {}]
  %s1 = inlined_call_operand.vmem [shape: f32[2,1,128], index: 1, kind: input, shape index: {}]
  %s2 = inlined_call_operand.vmem [shape: f32[1,128], index: 2, kind: input, shape index: {}]
  %s3 = inlined_call_operand.vmem [shape: f32[1,128], index: 3, kind: input, shape index: {}]
  %s4 = inlined_call_operand.vmem [shape: f32[128,128], index: 4, kind: input, shape index: {}]
  %s5 = inlined_call_operand.hbm [shape: f32[2,16,128], index: 5, kind: output, shape index: {0}]
  %s6 = inlined_call_operand.hbm [shape: f32[2,16,128], index: 6, kind: output, shape index: {1}]
  %7 = xla_tuple %s5, %s6
  %s8 = sld [smem:[#allocation0]]
  $region65: #{block_forward_impl.3} parent=0
    _
  %s10 = ssub.s32 1, %s8
  %s11 = scalar_select 0, %s10, %s8
  $region1: #{block_forward_impl.3} parent=0
    #allocation2 [shape = 'u8[16384]{0}', space=vmem, size = 0x4000, scoped, tag = 'input window, operand 0']
    #allocation3 [shape = 's32[2]{0}', space=sflag, size = 0x8, scoped, tag = 'scoped memory for block_forward_impl.3']
    #allocation4 [shape = 's32[2]{0}', space=sflag, size = 0x8, scoped, tag = 'scoped memory for block_forward_impl.3']
    #allocation5 [shape = 'u8[16384]{0}', space=vmem, size = 0x4000, scoped, tag = 'output window, operand 0']
    #allocation6 [shape = 'u8[16384]{0}', space=vmem, size = 0x4000, scoped, tag = 'output window, operand 1']
    #allocation7 [shape = 's32[2]{0}', space=sflag, size = 0x8, scoped, tag = 'scoped memory for block_forward_impl.3']
    %12 = vsyncpa [#allocation3], 0
    %s13 = scalar_lea.sflag [#allocation3], 1
    %14 = vsyncpa %s13, 0
    %15 = vsyncpa [#allocation4], 0
    %s16 = scalar_lea.sflag [#allocation4], 1
    %17 = vsyncpa %s16, 0
    %18 = vsyncpa [#allocation7], 0
    %s19 = scalar_lea.sflag [#allocation7], 1
    %20 = vsyncpa %s19, 0
    loop: start=0, step=1, limit=4
    $region2: #{block_forward_impl.3} parent=1 // loop_pre_header
      _
    $region3: #{block_forward_impl.3} parent=1 // loop_header
      %s22 = sphi 0, %s26
      %p23 = scmp.ge.s32.totalorder %s22, 4
      %s29 = sphi 0, %s41
      %s30 = sphi 0, %s37
      %s31 = sphi 0, %s29
      %s32 = sphi 0, %s30
      %s33 = sphi 0, %s31
      %s34 = sphi 0, %s32
      %s46 = sphi 0, %s48
      %s49 = sphi 0, %s46
      %s50 = sphi 0, %s49
      %s66 = sphi 0, %s50
      %s72 = sphi 0, %s74
      %s75 = sphi 0, %s72
      %s76 = sphi 0, %s75
      %s92 = sphi 0, %s76
      %s96 = sphi 0, %s96
      %s98 = sphi 0, %s96
      %s99 = sphi 0, %s98
      %s113 = sphi 0, %s99
      %s117 = sphi 0, %s117
      %s119 = sphi 0, %s117
      %s120 = sphi 0, %s119
      %s134 = sphi 0, %s120
      %s138 = sphi 0, %s138
      %s140 = sphi 0, %s138
      %s141 = sphi 0, %s140
      %s155 = sphi 0, %s141
      %s163 = sphi 0, %s165
      %s166 = sphi 0, %s163
      %s167 = sphi 0, %s166
      %s183 = sphi 0, %s167
      %s191 = sphi 0, %s193
      %s194 = sphi 0, %s191
      %s195 = sphi 0, %s194
      %s211 = sphi 0, %s195
    $region4: #{block_forward_impl.3} parent=1 // loop_header_branch
      %25 = sbr.rel (%p23) target = $region8
    $region5: #{block_forward_impl.3} parent=1 // loop_body
      %s27 = ssub.s32 %s22, 1
      %s28 = ssub.s32 %s22, 2
      %s35 = sadd.s32 1, %s30
      %p36 = scmp.ge.s32.totalorder %s35, 1
      %s37 = scalar_select %p36, 0, %s35
      %s38 = sadd.s32 1, %s29
      %s39 = scalar_select %p36, %s38, %s29
      %p40 = scmp.ge.s32.totalorder %s39, 2
      %s41 = scalar_select %p40, 0, %s39
      %s42 = ssub.s32 %s29, %s41
      %s43 = ssub.s32 %s30, %s37
      %s44 = sor.u32 %s42, %s43
      %p45 = scmp.eq.s32.totalorder %s44, 0
      %s47 = sadd.s32 %s46, 1
      %s48 = scalar_select %p45, %s46, %s47
      %p51 = pneg %p45
      %p52 = scmp.eq.s32.totalorder %s22, 1
      %p53 = por %p51, %p52
      %p54 = scmp.ne.s32.totalorder %s46, %s49
      %p55 = scmp.eq.s32.totalorder %s22, 0
      %p56 = por %p54, %p55
      %p57 = scmp.ne.s32.totalorder %s46, %s49
      %p58 = scmp.eq.s32.totalorder %s27, 1
      %p59 = por %p57, %p58
      %p60 = scmp.ne.s32.totalorder %s49, %s50
      %p61 = scmp.eq.s32.totalorder %s27, 0
      %p62 = por %p60, %p61
      %p63 = scmp.ne.s32.totalorder %s49, %s50
      %p64 = scmp.eq.s32.totalorder %s28, 1
      %p65 = por %p63, %p64
      %p67 = scmp.ne.s32.totalorder %s50, %s66
      %p68 = scmp.eq.s32.totalorder %s28, 0
      %p69 = por %p67, %p68
      %s70 = ssub.s32 %s29, %s41
      %p71 = scmp.eq.s32.totalorder %s70, 0
      %s73 = sadd.s32 %s72, 1
      %s74 = scalar_select %p71, %s72, %s73
      %p77 = pneg %p71
      %p78 = scmp.eq.s32.totalorder %s22, 1
      %p79 = por %p77, %p78
      %p80 = scmp.ne.s32.totalorder %s72, %s75
      %p81 = scmp.eq.s32.totalorder %s22, 0
      %p82 = por %p80, %p81
      %p83 = scmp.ne.s32.totalorder %s72, %s75
      %p84 = scmp.eq.s32.totalorder %s27, 1
      %p85 = por %p83, %p84
      %p86 = scmp.ne.s32.totalorder %s75, %s76
      %p87 = scmp.eq.s32.totalorder %s27, 0
      %p88 = por %p86, %p87
      %p89 = scmp.ne.s32.totalorder %s75, %s76
      %p90 = scmp.eq.s32.totalorder %s28, 1
      %p91 = por %p89, %p90
      %p93 = scmp.ne.s32.totalorder %s76, %s92
      %p94 = scmp.eq.s32.totalorder %s28, 0
      %p95 = por %p93, %p94
      %s97 = sadd.s32 %s96, 1
      %p100 = scmp.eq.s32.totalorder %s22, 1
      %p101 = scmp.ne.s32.totalorder %s96, %s98
      %p102 = scmp.eq.s32.totalorder %s22, 0
      %p103 = por %p101, %p102
      %p104 = scmp.ne.s32.totalorder %s96, %s98
      %p105 = scmp.eq.s32.totalorder %s27, 1
      %p106 = por %p104, %p105
      %p107 = scmp.ne.s32.totalorder %s98, %s99
      %p108 = scmp.eq.s32.totalorder %s27, 0
      %p109 = por %p107, %p108
      %p110 = scmp.ne.s32.totalorder %s98, %s99
      %p111 = scmp.eq.s32.totalorder %s28, 1
      %p112 = por %p110, %p111
      %p114 = scmp.ne.s32.totalorder %s99, %s113
      %p115 = scmp.eq.s32.totalorder %s28, 0
      %p116 = por %p114, %p115
      %s118 = sadd.s32 %s117, 1
      %p121 = scmp.eq.s32.totalorder %s22, 1
      %p122 = scmp.ne.s32.totalorder %s117, %s119
      %p123 = scmp.eq.s32.totalorder %s22, 0
      %p124 = por %p122, %p123
      %p125 = scmp.ne.s32.totalorder %s117, %s119
      %p126 = scmp.eq.s32.totalorder %s27, 1
      %p127 = por %p125, %p126
      %p128 = scmp.ne.s32.totalorder %s119, %s120
      %p129 = scmp.eq.s32.totalorder %s27, 0
      %p130 = por %p128, %p129
      %p131 = scmp.ne.s32.totalorder %s119, %s120
      %p132 = scmp.eq.s32.totalorder %s28, 1
      %p133 = por %p131, %p132
      %p135 = scmp.ne.s32.totalorder %s120, %s134
      %p136 = scmp.eq.s32.totalorder %s28, 0
      %p137 = por %p135, %p136
      %s139 = sadd.s32 %s138, 1
      %p142 = scmp.eq.s32.totalorder %s22, 1
      %p143 = scmp.ne.s32.totalorder %s138, %s140
      %p144 = scmp.eq.s32.totalorder %s22, 0
      %p145 = por %p143, %p144
      %p146 = scmp.ne.s32.totalorder %s138, %s140
      %p147 = scmp.eq.s32.totalorder %s27, 1
      %p148 = por %p146, %p147
      %p149 = scmp.ne.s32.totalorder %s140, %s141
      %p150 = scmp.eq.s32.totalorder %s27, 0
      %p151 = por %p149, %p150
      %p152 = scmp.ne.s32.totalorder %s140, %s141
      %p153 = scmp.eq.s32.totalorder %s28, 1
      %p154 = por %p152, %p153
      %p156 = scmp.ne.s32.totalorder %s141, %s155
      %p157 = scmp.eq.s32.totalorder %s28, 0
      %p158 = por %p156, %p157
      %s159 = ssub.s32 %s29, %s41
      %s160 = ssub.s32 %s30, %s37
      %s161 = sor.u32 %s159, %s160
      %p162 = scmp.eq.s32.totalorder %s161, 0
      %s164 = sadd.s32 %s163, 1
      %s165 = scalar_select %p162, %s163, %s164
      %p168 = pneg %p162
      %p169 = scmp.eq.s32.totalorder %s22, 1
      %p170 = por %p168, %p169
      %p171 = scmp.ne.s32.totalorder %s163, %s166
      %p172 = scmp.eq.s32.totalorder %s22, 0
      %p173 = por %p171, %p172
      %p174 = scmp.ne.s32.totalorder %s163, %s166
      %p175 = scmp.eq.s32.totalorder %s27, 1
      %p176 = por %p174, %p175
      %p177 = scmp.ne.s32.totalorder %s166, %s167
      %p178 = scmp.eq.s32.totalorder %s27, 0
      %p179 = por %p177, %p178
      %p180 = scmp.ne.s32.totalorder %s166, %s167
      %p181 = scmp.eq.s32.totalorder %s28, 1
      %p182 = por %p180, %p181
      %p184 = scmp.ne.s32.totalorder %s167, %s183
      %p185 = scmp.eq.s32.totalorder %s28, 0
      %p186 = por %p184, %p185
      %s187 = ssub.s32 %s29, %s41
      %s188 = ssub.s32 %s30, %s37
      %s189 = sor.u32 %s187, %s188
      %p190 = scmp.eq.s32.totalorder %s189, 0
      %s192 = sadd.s32 %s191, 1
      %s193 = scalar_select %p190, %s191, %s192
      %p196 = pneg %p190
      %p197 = scmp.eq.s32.totalorder %s22, 1
      %p198 = por %p196, %p197
      %p199 = scmp.ne.s32.totalorder %s191, %s194
      %p200 = scmp.eq.s32.totalorder %s22, 0
      %p201 = por %p199, %p200
      %p202 = scmp.ne.s32.totalorder %s191, %s194
      %p203 = scmp.eq.s32.totalorder %s27, 1
      %p204 = por %p202, %p203
      %p205 = scmp.ne.s32.totalorder %s194, %s195
      %p206 = scmp.eq.s32.totalorder %s27, 0
      %p207 = por %p205, %p206
      %p208 = scmp.ne.s32.totalorder %s194, %s195
      %p209 = scmp.eq.s32.totalorder %s28, 1
      %p210 = por %p208, %p209
      %p212 = scmp.ne.s32.totalorder %s195, %s211
      %p213 = scmp.eq.s32.totalorder %s28, 0
      %p214 = por %p212, %p213
      %p215 = scmp.le.s32.totalorder 1, %s22
      %p216 = scmp.lt.s32.totalorder %s22, 3
      %p217 = pnand %p215, %p216
      %p218 = pneg %p217
      // Predicated region
      $region9: #{block_forward_impl.3} parent=5 // pred_check
        _
      $region10: #{block_forward_impl.3} parent=5 // pred_check_branch
        %220 = sbr.rel (%p217) target = $region12
      $region11: #{block_forward_impl.3} parent=5 // pred_region
        %s221 = ssub.s32 %s22, 1
        // Predicated region
        $region13: #{block_forward_impl.3} parent=11 // pred_check
          %p222 = pneg %p109
        $region14: #{block_forward_impl.3} parent=11 // pred_check_branch
          %224 = sbr.rel (%p222) target = $region16
        $region15: #{block_forward_impl.3} parent=11 // pred_region
          _
        $region16: #{block_forward_impl.3} parent=11 // pred_fallthru
          _
        // Predicated region
        $region17: #{block_forward_impl.3} parent=11 // pred_check
          %p225 = pneg %p130
        $region18: #{block_forward_impl.3} parent=11 // pred_check_branch
          %227 = sbr.rel (%p225) target = $region20
        $region19: #{block_forward_impl.3} parent=11 // pred_region
          _
        $region20: #{block_forward_impl.3} parent=11 // pred_fallthru
          _
        // Predicated region
        $region21: #{block_forward_impl.3} parent=11 // pred_check
          %p228 = pneg %p151
        $region22: #{block_forward_impl.3} parent=11 // pred_check_branch
          %230 = sbr.rel (%p228) target = $region24
        $region23: #{block_forward_impl.3} parent=11 // pred_region
          _
        $region24: #{block_forward_impl.3} parent=11 // pred_fallthru
          _
      $region12: #{block_forward_impl.3} parent=5 // pred_fallthru
        _
      %p231 = scmp.lt.s32.totalorder %s22, 2
      // Predicated region
      $region25: #{block_forward_impl.3} parent=5 // pred_check
        %p232 = pneg %p231
      $region26: #{block_forward_impl.3} parent=5 // pred_check_branch
        %234 = sbr.rel (%p232) target = $region28
      $region27: #{block_forward_impl.3} parent=5 // pred_region
        // Predicated region
        $region29: #{block_forward_impl.3} parent=27 // pred_check
          %p235 = pneg %p56
        $region30: #{block_forward_impl.3} parent=27 // pred_check_branch
          %237 = sbr.rel (%p235) target = $region32
        $region31: #{block_forward_impl.3} parent=27 // pred_region
          %s238 = sand.u32 %s46, 1
          %s239 = scalar_lea.sflag [#allocation3], %s238
          %s240 = sand.u32 %s46, 1
          %s241 = smul.addr %s240, 16
          %s242 = scalar_lea.vmem [#allocation2], %s241
          %s243 = smul.u32 2, %s30
          %s245 = ssub.s32 256, 256
          %246 = vsyncadd %s239, %s245
          %s247 = smul.addr %s29, 2
          %s248 = sadd.s32 %s243, %s247
          %s249 = smul.addr %s248, 128
          %s250 = scalar_lea.hbm %s0, %s249
          %s251 = sshll.u32 %s242, 4
          %s252 = int_to_ptr.vmem [resolvable:$true] %s251
          %257 = dma.hbm_to_vmem [thread:$0]  %s250, 256, %s252, %s239, 128, 128, 8
        $region32: #{block_forward_impl.3} parent=27 // pred_fallthru
          _
        // Predicated region
        $region33: #{block_forward_impl.3} parent=27 // pred_check
          %p258 = pneg %p82
        $region34: #{block_forward_impl.3} parent=27 // pred_check_branch
          %260 = sbr.rel (%p258) target = $region36
        $region35: #{block_forward_impl.3} parent=27 // pred_region
          %p261 = scmp.lt.s32.totalorder %s29, 1
          %s262 = scalar_select %p261, %s29, 1
          %s263 = scalar_lea.vmem %s1, %s262
        $region36: #{block_forward_impl.3} parent=27 // pred_fallthru
          _
      $region28: #{block_forward_impl.3} parent=5 // pred_fallthru
        _
      %p264 = scmp.le.s32.totalorder 1, %s22
      %p265 = scmp.lt.s32.totalorder %s22, 3
      %p266 = pnand %p264, %p265
      %p267 = pneg %p266
      // Predicated region
      $region37: #{block_forward_impl.3} parent=5 // pred_check
        _
      $region38: #{block_forward_impl.3} parent=5 // pred_check_branch
        %269 = sbr.rel (%p266) target = $region40
      $region39: #{block_forward_impl.3} parent=5 // pred_region
        %s270 = ssub.s32 %s22, 1
        %s271 = sand.u32 %s49, 1
        %s272 = scalar_lea.sflag [#allocation3], %s271
        %s273 = sand.u32 %s49, 1
        %s274 = smul.addr %s273, 16
        %s275 = scalar_lea.vmem [#allocation2], %s274
        // Predicated region
        $region41: #{block_forward_impl.3} parent=39 // pred_check
          %p276 = pneg %p62
        $region42: #{block_forward_impl.3} parent=39 // pred_check_branch
          %278 = sbr.rel (%p276) target = $region44
        $region43: #{block_forward_impl.3} parent=39 // pred_region
          %279 = dma.done %s272, 256
        $region44: #{block_forward_impl.3} parent=39 // pred_fallthru
          _
        %s280 = sand.u32 %s49, 1
        %s281 = scalar_lea.sflag [#allocation3], %s280
        %s282 = sand.u32 %s49, 1
        %s283 = smul.addr %s282, 16
        %s284 = scalar_lea.vmem [#allocation2], %s283
        %p285 = pneg %p62
        %p286 = pneg %p59
        %p287 = scmp.lt.s32.totalorder %s31, 1
        %s288 = scalar_select %p287, %s31, 1
        %s289 = scalar_lea.vmem %s1, %s288
        %p290 = pneg %p88
        %p291 = pneg %p85
        %p292 = pneg %p109
        %p293 = pneg %p106
        %p294 = pneg %p130
        %p295 = pneg %p127
        %p296 = pneg %p151
        %p297 = pneg %p148
        %p298 = pneg %p179
        %p299 = pneg %p176
        %s300 = sand.u32 %s166, 1
        %s301 = scalar_lea.sflag [#allocation4], %s300
        %s302 = sand.u32 %s166, 1
        %s303 = smul.addr %s302, 16
        %s304 = scalar_lea.vmem [#allocation5], %s303
        %p305 = pneg %p207
        %p306 = pneg %p204
        %s307 = sand.u32 %s194, 1
        %s308 = scalar_lea.sflag [#allocation7], %s307
        %s309 = sand.u32 %s194, 1
        %s310 = smul.addr %s309, 16
        %s311 = scalar_lea.vmem [#allocation6], %s310
        %s312 = smul.u32 2, %s32
        %p313 = scmp.lt.s32.totalorder %s31, 1
        %s314 = scalar_select %p313, %s31, 1
        %s315 = scalar_lea.vmem %s1, %s314
        %s316 = smul.u32 2, %s32
        %s317 = smul.u32 2, %s32
        %v318 = vld [vmem:[%s275] sm:$0xff]
        %v319 = vld [vmem:[%s275 + $0x8] sm:$0xff]
        %v320 = vld [vmem:[%s315] sm:$0x1]
        %v321 = vld [vmem:[%s2] sm:$0x1]
        %v322 = vld [vmem:[%s3] sm:$0x1]
        %v323 = vld [vmem:[%s4] sm:$0xff]
        %v324 = vld [vmem:[%s4 + $0x8] sm:$0xff]
        %v325 = vld [vmem:[%s4 + $0x10] sm:$0xff]
        %v326 = vld [vmem:[%s4 + $0x18] sm:$0xff]
        %v327 = vld [vmem:[%s4 + $0x20] sm:$0xff]
        %v328 = vld [vmem:[%s4 + $0x28] sm:$0xff]
        %v329 = vld [vmem:[%s4 + $0x30] sm:$0xff]
        %v330 = vld [vmem:[%s4 + $0x38] sm:$0xff]
        %v331 = vld [vmem:[%s4 + $0x40] sm:$0xff]
        %v332 = vld [vmem:[%s4 + $0x48] sm:$0xff]
        %v333 = vld [vmem:[%s4 + $0x50] sm:$0xff]
        %v334 = vld [vmem:[%s4 + $0x58] sm:$0xff]
        %v335 = vld [vmem:[%s4 + $0x60] sm:$0xff]
        %v336 = vld [vmem:[%s4 + $0x68] sm:$0xff]
        %v337 = vld [vmem:[%s4 + $0x70] sm:$0xff]
        %v338 = vld [vmem:[%s4 + $0x78] sm:$0xff]
        %339 = vadd.xlane.f32.xlu0 %v318
        %v340 = vpop.xlane.xlu0 %339
        %341 = vadd.xlane.f32.xlu0 %v319
        %v342 = vpop.xlane.xlu0 %341
        %v343 = vrcp.pop 128.0
        %v344 = vmul.f32 %v340, %v343
        %v345 = vmul.f32 %v342, %v343
        %v346 = vsub.f32 %v318, %v344
        %v347 = vsub.f32 %v319, %v345
        %v348 = vmul.f32 %v346, %v346
        %v349 = vmul.f32 %v347, %v347
        %350 = vadd.xlane.f32.xlu0 %v348
        %v351 = vpop.xlane.xlu0 %350
        %352 = vadd.xlane.f32.xlu0 %v349
        %v353 = vpop.xlane.xlu0 %352
        %v354 = vmul.f32 %v351, %v343
        %v355 = vmul.f32 %v353, %v343
        %v356 = vadd.f32 %v354, 1e-05
        %v357 = vadd.f32 %v355, 1e-05
        %v358 = vrsqrt.pop %v356
        %v359 = vrsqrt.pop %v357
        %v360 = vmul.f32 %v346, %v358
        %v361 = vmul.f32 %v347, %v359
        %v363 = vlaneseq
        %v364 = vshrl.u32 %v363, 7
        %v365 = vsub.s32 0, %v364
        %v366 = vrot.slane %v321, %v365
        %v368 = vmul.f32 %v360, %v366
        %v369 = vmul.f32 %v361, %v366
        %v371 = vlaneseq
        %v372 = vshrl.u32 %v371, 7
        %v373 = vsub.s32 0, %v372
        %v374 = vrot.slane %v322, %v373
        %v376 = vadd.f32 %v368, %v374
        %v377 = vadd.f32 %v369, %v374
        %v379 = vlaneseq
        %v380 = vshrl.u32 %v379, 7
        %v381 = vsub.s32 0, %v380
        %v382 = vrot.slane %v320, %v381
        %384 = vmatprep.subr.mxu0 0.0
        %385 = vmatpush1.msra.mxu0 %v338
        %386 = vmatprep.subr.mxu0 0.0
        %387 = vmatpush1.msra.mxu0 %v337
        %388 = vmatprep.subr.mxu0 0.0
        %389 = vmatpush1.msra.mxu0 %v336
        %390 = vmatprep.subr.mxu0 0.0
        %391 = vmatpush1.msra.mxu0 %v335
        %392 = vmatprep.subr.mxu0 0.0
        %393 = vmatpush1.msra.mxu0 %v334
        %394 = vmatprep.subr.mxu0 0.0
        %395 = vmatpush1.msra.mxu0 %v333
        %396 = vmatprep.subr.mxu0 0.0
        %397 = vmatpush1.msra.mxu0 %v332
        %398 = vmatprep.subr.mxu0 0.0
        %399 = vmatpush1.msra.mxu0 %v331
        %400 = vmatprep.subr.mxu0 0.0
        %401 = vmatpush1.msra.mxu0 %v330
        %402 = vmatprep.subr.mxu0 0.0
        %403 = vmatpush1.msra.mxu0 %v329
        %404 = vmatprep.subr.mxu0 0.0
        %405 = vmatpush1.msra.mxu0 %v328
        %406 = vmatprep.subr.mxu0 0.0
        %407 = vmatpush1.msra.mxu0 %v327
        %408 = vmatprep.subr.mxu0 0.0
        %409 = vmatpush1.msra.mxu0 %v326
        %410 = vmatprep.subr.mxu0 0.0
        %411 = vmatpush1.msra.mxu0 %v325
        %412 = vmatprep.subr.mxu0 0.0
        %413 = vmatpush1.msra.mxu0 %v324
        %414 = vmatprep.subr.mxu0 0.0
        %415 = vmatpush1.msra.mxu0 %v323
        %416 = vmatprep.subr.mxu0 0.0
        %417 = vmatpush2.msra.mxu0 0.0
        %418 = vmatprep.subr.mxu0 0.0
        %419 = vmatpush2.msra.mxu0 0.0
        %420 = vmatprep.subr.mxu0 0.0
        %421 = vmatpush2.msra.mxu0 0.0
        %422 = vmatprep.subr.mxu0 0.0
        %423 = vmatpush2.msra.mxu0 0.0
        %424 = vmatprep.subr.mxu0 0.0
        %425 = vmatpush2.msra.mxu0 0.0
        %426 = vmatprep.subr.mxu0 0.0
        %427 = vmatpush2.msra.mxu0 0.0
        %428 = vmatprep.subr.mxu0 0.0
        %429 = vmatpush2.msra.mxu0 0.0
        %430 = vmatprep.subr.mxu0 0.0
        %431 = vmatpush2.msra.mxu0 0.0
        %432 = vmatprep.subr.mxu0 0.0
        %433 = vmatpush2.msra.mxu0 0.0
        %434 = vmatprep.subr.mxu0 0.0
        %435 = vmatpush2.msra.mxu0 0.0
        %436 = vmatprep.subr.mxu0 0.0
        %437 = vmatpush2.msra.mxu0 0.0
        %438 = vmatprep.subr.mxu0 0.0
        %439 = vmatpush2.msra.mxu0 0.0
        %440 = vmatprep.subr.mxu0 0.0
        %441 = vmatpush2.msra.mxu0 0.0
        %442 = vmatprep.subr.mxu0 0.0
        %443 = vmatpush2.msra.mxu0 0.0
        %444 = vmatprep.subr.mxu0 0.0
        %445 = vmatpush2.msra.mxu0 0.0
        %446 = vmatprep.subr.mxu0 0.0
        %447 = vmatpush2.msra.mxu0 0.0
        %448 = vmatprep.mubr.f32.mxu0 0.0
        %449 = vmatmul.mubr.f32.gmra.mxu0 %v376
        %v450 = vpop.f32.mrf.mxu0
        %v451 = vadd.f32 %v382, %v450
        %v452 = vpop.f32.mrf.mxu0
        %453 = vmatprep.mubr.f32.mxu0 0.0
        %454 = vmatmul.mubr.f32.gmra.mxu0 %v377
        %v455 = vpop.f32.mrf.mxu0
        %v456 = vadd.f32 %v382, %v455
        %v457 = vpop.f32.mrf.mxu0
        %458 = vdwg.mxu0
        %459 = vst [vmem:[%s304] sm:$0xff] %v451
        %460 = vst [vmem:[%s304 + $0x8] sm:$0xff] %v456
        %461 = vst [vmem:[%s311] sm:$0xff] %v318
        %462 = vst [vmem:[%s311 + $0x8] sm:$0xff] %v319
        %s463 = sand.u32 %s166, 1
        %s464 = scalar_lea.sflag [#allocation4], %s463
        %s465 = sand.u32 %s166, 1
        %s466 = smul.addr %s465, 16
        %s467 = scalar_lea.vmem [#allocation5], %s466
        %s468 = sand.u32 %s194, 1
        %s469 = scalar_lea.sflag [#allocation7], %s468
        %s470 = sand.u32 %s194, 1
        %s471 = smul.addr %s470, 16
        %s472 = scalar_lea.vmem [#allocation6], %s471
        // Predicated region
        $region45: #{block_forward_impl.3} parent=39 // pred_check
          %p473 = pneg %p176
        $region46: #{block_forward_impl.3} parent=39 // pred_check_branch
          %475 = sbr.rel (%p473) target = $region48
        $region47: #{block_forward_impl.3} parent=39 // pred_region
          %s476 = smul.u32 2, %s32
          %s478 = ssub.s32 256, 256
          %479 = vsyncadd %s464, %s478
          %s480 = smul.addr %s31, 2
          %s481 = sadd.s32 %s476, %s480
          %s482 = smul.addr %s481, 128
          %s483 = scalar_lea.hbm %s5, %s482
          %s484 = sshll.u32 %s467, 4
          %s485 = int_to_ptr.vmem [resolvable:$true] %s484
          %490 = dma.vmem_to_hbm [thread:$0]  %s485, 256, %s483, %s464, 128, 128, 8
        $region48: #{block_forward_impl.3} parent=39 // pred_fallthru
          _
        // Predicated region
        $region49: #{block_forward_impl.3} parent=39 // pred_check
          %p491 = pneg %p204
        $region50: #{block_forward_impl.3} parent=39 // pred_check_branch
          %493 = sbr.rel (%p491) target = $region52
        $region51: #{block_forward_impl.3} parent=39 // pred_region
          %s494 = smul.u32 2, %s32
          %s496 = ssub.s32 256, 256
          %497 = vsyncadd %s469, %s496
          %s498 = smul.addr %s31, 2
          %s499 = sadd.s32 %s494, %s498
          %s500 = smul.addr %s499, 128
          %s501 = scalar_lea.hbm %s6, %s500
          %s502 = sshll.u32 %s472, 4
          %s503 = int_to_ptr.vmem [resolvable:$true] %s502
          %508 = dma.vmem_to_hbm [thread:$0]  %s503, 256, %s501, %s469, 128, 128, 8
        $region52: #{block_forward_impl.3} parent=39 // pred_fallthru
          _
      $region40: #{block_forward_impl.3} parent=5 // pred_fallthru
        _
      %p509 = scmp.le.s32.totalorder 2, %s22
      // Predicated region
      $region53: #{block_forward_impl.3} parent=5 // pred_check
        %p510 = pneg %p509
      $region54: #{block_forward_impl.3} parent=5 // pred_check_branch
        %512 = sbr.rel (%p510) target = $region56
      $region55: #{block_forward_impl.3} parent=5 // pred_region
        %s513 = ssub.s32 %s22, 2
        // Predicated region
        $region57: #{block_forward_impl.3} parent=55 // pred_check
          %p514 = pneg %p182
        $region58: #{block_forward_impl.3} parent=55 // pred_check_branch
          %516 = sbr.rel (%p514) target = $region60
        $region59: #{block_forward_impl.3} parent=55 // pred_region
          %s517 = sand.u32 %s167, 1
          %s518 = scalar_lea.sflag [#allocation4], %s517
          %s519 = sand.u32 %s167, 1
          %s520 = smul.addr %s519, 16
          %s521 = scalar_lea.vmem [#allocation5], %s520
          %522 = dma.done %s518, 256
        $region60: #{block_forward_impl.3} parent=55 // pred_fallthru
          _
        // Predicated region
        $region61: #{block_forward_impl.3} parent=55 // pred_check
          %p523 = pneg %p210
        $region62: #{block_forward_impl.3} parent=55 // pred_check_branch
          %525 = sbr.rel (%p523) target = $region64
        $region63: #{block_forward_impl.3} parent=55 // pred_region
          %s526 = sand.u32 %s195, 1
          %s527 = scalar_lea.sflag [#allocation7], %s526
          %s528 = sand.u32 %s195, 1
          %s529 = smul.addr %s528, 16
          %s530 = scalar_lea.vmem [#allocation6], %s529
          %531 = dma.done %s527, 256
        $region64: #{block_forward_impl.3} parent=55 // pred_fallthru
          _
      $region56: #{block_forward_impl.3} parent=5 // pred_fallthru
        _
    $region6: #{block_forward_impl.3} parent=1 // loop_footer
      %s26 = sadd.s32 1, %s22
    $region7: #{block_forward_impl.3} parent=1 // loop_footer_branch
      %21 = sbr.rel target = $region3
    $region8: #{block_forward_impl.3} parent=1 // loop_exit
      _
    %532 = vsyncpa [#allocation3], 1
    %s533 = scalar_lea.sflag [#allocation3], 1
    %534 = vsyncpa %s533, 1
    %535 = vsyncpa [#allocation4], 1
    %s536 = scalar_lea.sflag [#allocation4], 1
    %537 = vsyncpa %s536, 1
    %538 = vsyncpa [#allocation7], 1
    %s539 = scalar_lea.sflag [#allocation7], 1
    %540 = vsyncpa %s539, 1

</llo_original>
